<compile_context>
chip_gen: v7x
topology: tpu7x:2x2x1
jax: 0.10.0
libtpu: 0.0.40
codegen_flags: <defaults>
</compile_context>

<pallas_src>
import functools

import jax
import jax.numpy as jnp
from jax.experimental import pallas as pl
from jax.experimental.pallas import tpu as pltpu


# Cap on the statically unrolled per-sample store loop.  Only cheap ops
# (128-aligned lane slice, store, lane reduce) live inside it -- the heavy
# matmuls are batch-folded outside -- so a modest unroll is fine.
_MAX_BATCH_BLOCK = 32


def count_pipnet_kernel(x_ref, wnetT_ref, bnetT_ref, waddT_ref, baddT_ref,
                        whead_ref, bcls_ref,
                        proto_ref, counts_ref, out_ref, *, max_count):
    # x_ref:     [C_pad, bt*HW]  (channels on sublanes, batch*spatial on lanes)
    # proto_ref: [bt, P, HW]     (HW is a multiple of 128 -> lane-dense stores)
    bt, P, HW = proto_ref.shape

    x = x_ref[...]                                           # [C_pad, bt*HW]
    wnetT = wnetT_ref[...]                                   # [D, C_pad]
    waddT = waddT_ref[...]                                   # [P, D]

    # Backbone stand-in: pointwise (1x1) conv + ReLU.  Batch folded into the
    # matmul free dim -> a single MXU push per grid step.
    z = jnp.dot(wnetT, x, preferred_element_type=jnp.float32) + bnetT_ref[...]
    z = jnp.maximum(z, 0.0)                                  # [D, bt*HW] f32

    # Add-on: 1x1 conv to prototype logits + softmax over prototypes (axis 0).
    logits = (jnp.dot(waddT, z.astype(waddT.dtype),
                      preferred_element_type=jnp.float32)
              + baddT_ref[...])                              # [P, bt*HW] f32
    m = jnp.max(logits, axis=0, keepdims=True)               # [1, bt*HW]
    e = jnp.exp(logits - m)
    denom = jnp.sum(e, axis=0, keepdims=True)                # [1, bt*HW]
    # approx=True reciprocal could flip round() at counts ~ x.5; keep exact.
    probs = e * pl.reciprocal(denom, approx=False)           # [P, bt*HW] f32

    # Per-sample proto stores (static, 128-aligned lane slices) + in-register
    # f32 count accumulation.  No read-back of the proto output block, and the
    # counts stay f32 regardless of proto_ref.dtype.
    for b in range(bt):                                      # bt <= _MAX_BATCH_BLOCK
        pb = probs[:, b * HW:(b + 1) * HW]                   # [P, HW]
        proto_ref[b] = pb.astype(proto_ref.dtype)
        counts_ref[b, :] = jnp.sum(pb, axis=-1)              # [P] f32

    # Tiny [bt, P] f32 block reload (negligible; kept in VMEM).
    counts = counts_ref[...]                                 # [bt, P]

    # STE_Round forward = round; ClampSTE forward = clamp(0, max_count).
    clamped = jnp.clip(jnp.round(counts), 0.0, float(max_count))

    # Folded head: (_intermediate @ relu(_classification.weight)) + bias.
    out_ref[...] = (jnp.dot(clamped, whead_ref[...],
                            preferred_element_type=jnp.float32)
                    + bcls_ref[...])                         # [bt, NC]


def _physical_vmem_bytes():
    """Per-core physical VMEM (generation-aware); conservative fallback."""
    try:
        info = pltpu.get_tpu_info()
        cap = int(getattr(info, "vmem_capacity_bytes", 0) or 0)
        if cap > 0:
            return cap
    except Exception:
        pass
    return 64 * 1024 * 1024  # v7x-sized fallback (safe lower bound)


def _vmem_estimate(bt, C_pad, D, P, NC, HW, in_isz, proto_isz):
    """Working-set estimate for one grid step (double-buffering included)."""
    n = bt * HW
    est = 2 * C_pad * n * in_isz                        # x block (x2 buffers)
    est += 2 * bt * P * HW * proto_isz                  # proto out block (x2 buffers)
    est += 2 * (D * C_pad + P * D) * in_isz             # transposed weights
    est += 2 * (D + P + P * max(NC, 128) + 128) * 4     # biases + folded head (lane pad)
    est += 2 * bt * (max(P, 128) + max(NC, 128)) * 4    # counts / logits out blocks
    est += (D + 3 * P) * n * 4                          # live f32 intermediates
    est += 256 * 1024                                   # tile padding / misc slop
    return int(est)


def _pick_batch_block(B, budget, est_fn):
    """Largest divisor of B whose working set fits the VMEM budget."""
    best = 1
    for d in range(1, min(B, _MAX_BATCH_BLOCK) + 1):
        if B % d == 0 and est_fn(d) <= budget:
            best = d
    return best


def count_pipnet_forward(x_nchw, params, max_count=3, compute_dtype=None,
                         proto_dtype=jnp.float32, batch_block=None):
    """Returns (proto_features [B,P,H,W], counts [B,P], logits [B,NC])."""
    wnet, bnet, wadd, badd, wint, wcls, bcls = params
    B, C, H, W = x_nchw.shape
    HW = H * W
    D = wnet.shape[1]
    P = wadd.shape[1]
    NC = wcls.shape[1]

    if compute_dtype is None:
        # bf16 is MXU-native on v5e/v6e/v7x and halves input HBM/DMA traffic;
        # pass jnp.float32 explicitly for bit-faithful module semantics.
        compute_dtype = jnp.bfloat16

    # Pad input channels to a sublane multiple (zeros -> result unchanged).
    C_pad = max(8, ((C + 7) // 8) * 8)

    # NCHW -> [C_pad, B*HW].  The input is far smaller than the proto output,
    # so this single wrapper transpose is cheap and buys batch-folded matmuls.
    x = jnp.transpose(x_nchw.reshape(B, C, HW), (1, 0, 2)).reshape(C, B * HW)
    x = jnp.pad(x, ((0, C_pad - C), (0, 0))).astype(compute_dtype)

    # One-time tiny weight prep (transposed form + folded classifier head).
    wnetT = jnp.pad(jnp.transpose(wnet), ((0, 0), (0, C_pad - C)))
    wnetT = wnetT.astype(compute_dtype)                      # [D, C_pad]
    bnetT = jnp.transpose(bnet).astype(jnp.float32)          # [D, 1]
    waddT = jnp.transpose(wadd).astype(compute_dtype)        # [P, D]
    baddT = jnp.transpose(badd).astype(jnp.float32)          # [P, 1]
    w_head = (wint @ jnp.maximum(wcls, 0.0)).astype(jnp.float32)  # [P, NC]
    bcls = bcls.astype(jnp.float32)                          # [1, NC]

    # Generation-aware block-size / VMEM-limit selection.
    in_isz = jnp.dtype(compute_dtype).itemsize
    proto_isz = jnp.dtype(proto_dtype).itemsize
    est_fn = functools.partial(_vmem_estimate, C_pad=C_pad, D=D, P=P, NC=NC,
                               HW=HW, in_isz=in_isz, proto_isz=proto_isz)
    phys = _physical_vmem_bytes()
    budget = phys // 2                       # headroom for compiler scratch
    bt = _pick_batch_block(B, budget, est_fn) if batch_block is None else batch_block
    assert bt >= 1 and B % bt == 0, "batch_block must divide batch size"
    grid = (B // bt,)

    est = est_fn(bt)
    vmem_limit = int(min(int(0.9 * phys),
                         max(16 * 1024 * 1024, est + (4 << 20))))

    kernel = functools.partial(count_pipnet_kernel, max_count=max_count)

    proto_flat, counts, logits = pl.pallas_call(
        kernel,
        out_shape=(
            jax.ShapeDtypeStruct((B, P, HW), proto_dtype),
            jax.ShapeDtypeStruct((B, P), jnp.float32),
            jax.ShapeDtypeStruct((B, NC), jnp.float32),
        ),
        grid_spec=pltpu.PrefetchScalarGridSpec(
            num_scalar_prefetch=0,
            grid=grid,
            in_specs=[
                pl.BlockSpec((C_pad, bt * HW), lambda g: (0, g)),   # x
                # Grid-invariant weights: constant index_map -> not re-DMA'd
                # per step.  (Single-buffering them via pipeline_mode would
                # also halve their VMEM footprint; negligible at these sizes.)
                pl.BlockSpec((D, C_pad), lambda g: (0, 0)),         # wnetT
                pl.BlockSpec((D, 1), lambda g: (0, 0)),             # bnetT
                pl.BlockSpec((P, D), lambda g: (0, 0)),             # waddT
                pl.BlockSpec((P, 1), lambda g: (0, 0)),             # baddT
                pl.BlockSpec((P, NC), lambda g: (0, 0)),            # w_head
                pl.BlockSpec((1, NC), lambda g: (0, 0)),            # bcls
            ],
            out_specs=[
                pl.BlockSpec((bt, P, HW), lambda g: (g, 0, 0)),     # proto (lane-dense)
                pl.BlockSpec((bt, P), lambda g: (g, 0)),            # counts
                pl.BlockSpec((bt, NC), lambda g: (g, 0)),           # logits
            ],
        ),
        compiler_params=pltpu.CompilerParams(
            dimension_semantics=("parallel",),
            vmem_limit_bytes=vmem_limit),
    )(x, wnetT, bnetT, waddT, baddT, w_head, bcls)

    # [B, P, HW] -> [B, P, H, W]: pure reshape, already NCHW-ordered.
    proto_features = proto_flat.reshape(B, P, H, W)
    return proto_features, counts, logits


def _reference_forward(x_nchw, params, max_count=3):
    """Pure-JAX f32 reference with the original module's semantics."""
    wnet, bnet, wadd, badd, wint, wcls, bcls = params
    B, C, H, W = x_nchw.shape
    x = jnp.transpose(x_nchw, (0, 2, 3, 1)).reshape(B, H * W, C)
    z = jnp.maximum(x @ wnet + bnet, 0.0)
    logits = z @ wadd + badd
    probs = jax.nn.softmax(logits, axis=-1)
    counts = jnp.sum(probs, axis=1)
    clamped = jnp.clip(jnp.round(counts), 0.0, float(max_count))
    inter = clamped @ wint
    out = inter @ jnp.maximum(wcls, 0.0) + bcls
    proto = jnp.transpose(probs.reshape(B, H, W, -1), (0, 3, 1, 2))
    return proto, counts, out


if __name__ == "__main__":
    # Small, deterministic synthetic shapes consistent with the module.
    B, C, H, W = 2, 4, 16, 16       # input [batch, channels, height, width]
    D = 32                          # backbone feature channels
    P = 16                          # num_prototypes
    F = 32                          # num_features (classifier input dim)
    NC = 3                          # num_classes
    MAX_COUNT = 3

    key = jax.random.PRNGKey(0)
    kx, k1, k2, k3, k4, k5, k6, k7 = jax.random.split(key, 8)

    x = jax.random.normal(kx, (B, C, H, W), dtype=jnp.float32)

    # TODO(synk): _intermediate / _classification definitions are not given in
    # the reference; modeled as bias-free linear and non-negative (relu-weight)
    # linear, matching how they are used in forward().
    params = (
        0.3 * jax.random.normal(k1, (C, D), dtype=jnp.float32),    # wnet
        0.1 * jax.random.normal(k2, (1, D), dtype=jnp.float32),    # bnet
        0.3 * jax.random.normal(k3, (D, P), dtype=jnp.float32),    # wadd
        0.1 * jax.random.normal(k4, (1, P), dtype=jnp.float32),    # badd
        0.3 * jax.random.normal(k5, (P, F), dtype=jnp.float32),    # wint
        0.3 * jax.random.normal(k6, (F, NC), dtype=jnp.float32),   # wcls
        0.1 * jax.random.normal(k7, (1, NC), dtype=jnp.float32),   # bcls
    )

    # Exact-precision run (f32), checked against the pure-JAX reference.
    proto, counts, logits = count_pipnet_forward(
        x, params, max_count=MAX_COUNT, compute_dtype=jnp.float32)
    jax.block_until_ready((proto, counts, logits))

    ref_proto, ref_counts, ref_logits = _reference_forward(x, params, MAX_COUNT)
    assert proto.shape == (B, P, H, W)
    assert counts.shape == (B, P)
    assert logits.shape == (B, NC)
    assert jnp.allclose(proto, ref_proto, atol=1e-4)
    assert jnp.allclose(counts, ref_counts, atol=1e-3)
    assert jnp.allclose(logits, ref_logits, atol=1e-3)

    # Default (bf16 matmul-input) fast path: exercise it and sanity-check.
    # Numerics are not bit-compared (bf16 can flip round() near count ~ x.5).
    proto_bf, counts_bf, logits_bf = count_pipnet_forward(
        x, params, max_count=MAX_COUNT)
    jax.block_until_ready((proto_bf, counts_bf, logits_bf))
    assert proto_bf.shape == (B, P, H, W)
    assert bool(jnp.isfinite(proto_bf).all())
    assert bool(jnp.isfinite(counts_bf).all())
    assert bool(jnp.isfinite(logits_bf).all())

    print("KERNEL_OK")
</pallas_src>

<mosaic_0001>
module attributes {stable_mosaic.version = 11 : i64} {
  func.func @count_pipnet_kernel(%arg0: i32, %arg1: memref<8x512xf32, #tpu.memory_space<vmem>>, %arg2: memref<32x8xf32, #tpu.memory_space<vmem>>, %arg3: memref<32x1xf32, #tpu.memory_space<vmem>>, %arg4: memref<16x32xf32, #tpu.memory_space<vmem>>, %arg5: memref<16x1xf32, #tpu.memory_space<vmem>>, %arg6: memref<16x3xf32, #tpu.memory_space<vmem>>, %arg7: memref<1x3xf32, #tpu.memory_space<vmem>>, %arg8: memref<2x16x256xf32, #tpu.memory_space<vmem>>, %arg9: memref<2x16xf32, #tpu.memory_space<vmem>>, %arg10: memref<2x3xf32, #tpu.memory_space<vmem>>) attributes {dimension_semantics = [#tpu.dimension_semantics<parallel>], iteration_bounds = array<i64: 1>, scalar_prefetch = 0 : i64, scratch_operands = 0 : i64, tpu.core_type = #tpu.core_type<tc>, window_params = [{transform_indices = @transform_0, window_bounds = array<i64: 8, 512>}, {pipeline_mode = #tpu.pipeline_mode<synchronous>, transform_indices = @transform_1, window_bounds = array<i64: 32, 8>}, {pipeline_mode = #tpu.pipeline_mode<synchronous>, transform_indices = @transform_2, window_bounds = array<i64: 32, 1>}, {pipeline_mode = #tpu.pipeline_mode<synchronous>, transform_indices = @transform_3, window_bounds = array<i64: 16, 32>}, {pipeline_mode = #tpu.pipeline_mode<synchronous>, transform_indices = @transform_4, window_bounds = array<i64: 16, 1>}, {pipeline_mode = #tpu.pipeline_mode<synchronous>, transform_indices = @transform_5, window_bounds = array<i64: 16, 3>}, {pipeline_mode = #tpu.pipeline_mode<synchronous>, transform_indices = @transform_6, window_bounds = array<i64: 1, 3>}, {transform_indices = @transform_7, window_bounds = array<i64: 2, 16, 256>}, {transform_indices = @transform_8, window_bounds = array<i64: 2, 16>}, {transform_indices = @transform_9, window_bounds = array<i64: 2, 3>}]} {
    %c0 = arith.constant 0 : index
    %c0_0 = arith.constant 0 : index
    %0 = vector.load %arg1[%c0, %c0_0] : memref<8x512xf32, #tpu.memory_space<vmem>>, vector<8x512xf32>
    %c0_1 = arith.constant 0 : index
    %c0_2 = arith.constant 0 : index
    %1 = vector.load %arg2[%c0_1, %c0_2] : memref<32x8xf32, #tpu.memory_space<vmem>>, vector<32x8xf32>
    %c0_3 = arith.constant 0 : index
    %c0_4 = arith.constant 0 : index
    %2 = vector.load %arg4[%c0_3, %c0_4] : memref<16x32xf32, #tpu.memory_space<vmem>>, vector<16x32xf32>
    %cst = arith.constant dense<0.000000e+00> : vector<32x512xf32>
    %3 = tpu.matmul %1, %0, %cst {dimension_numbers = #tpu.dot_dimension_numbers<[1], [0], [0], [1], [0, 0, 1, 1], [], []>} : vector<32x8xf32>, vector<8x512xf32>, vector<32x512xf32> -> vector<32x512xf32>
    %c0_5 = arith.constant 0 : index
    %c0_6 = arith.constant 0 : index
    %4 = vector.load %arg3[%c0_5, %c0_6] : memref<32x1xf32, #tpu.memory_space<vmem>>, vector<32x1xf32>
    %5 = vector.broadcast %4 : vector<32x1xf32> to vector<32x512xf32>
    %6 = arith.addf %3, %5 : vector<32x512xf32>
    %cst_7 = arith.constant 0.000000e+00 : f32
    %7 = vector.broadcast %cst_7 : f32 to vector<32x512xf32>
    %8 = arith.maximumf %6, %7 : vector<32x512xf32>
    %cst_8 = arith.constant dense<0.000000e+00> : vector<16x512xf32>
    %9 = tpu.matmul %2, %8, %cst_8 {dimension_numbers = #tpu.dot_dimension_numbers<[1], [0], [0], [1], [0, 0, 1, 1], [], []>} : vector<16x32xf32>, vector<32x512xf32>, vector<16x512xf32> -> vector<16x512xf32>
    %c0_9 = arith.constant 0 : index
    %c0_10 = arith.constant 0 : index
    %10 = vector.load %arg5[%c0_9, %c0_10] : memref<16x1xf32, #tpu.memory_space<vmem>>, vector<16x1xf32>
    %11 = vector.broadcast %10 : vector<16x1xf32> to vector<16x512xf32>
    %12 = arith.addf %9, %11 : vector<16x512xf32>
    %cst_11 = arith.constant dense<0xFF800000> : vector<512xf32>
    %13 = vector.multi_reduction <maximumf>, %12, %cst_11 [0] : vector<16x512xf32> to vector<512xf32>
    %14 = vector.shape_cast %13 : vector<512xf32> to vector<1x512xf32>
    %15 = vector.broadcast %14 : vector<1x512xf32> to vector<16x512xf32>
    %16 = arith.subf %12, %15 : vector<16x512xf32>
    %17 = math.exp %16 : vector<16x512xf32>
    %cst_12 = arith.constant dense<0.000000e+00> : vector<512xf32>
    %18 = vector.multi_reduction <add>, %17, %cst_12 [0] : vector<16x512xf32> to vector<512xf32>
    %19 = vector.shape_cast %18 : vector<512xf32> to vector<1x512xf32>
    %20 = tpu.reciprocal %19 : vector<1x512xf32> -> vector<1x512xf32>
    %21 = vector.broadcast %20 : vector<1x512xf32> to vector<16x512xf32>
    %22 = arith.mulf %17, %21 : vector<16x512xf32>
    %23 = vector.extract_strided_slice %22 {offsets = [0, 0], sizes = [16, 256], strides = [1, 1]} : vector<16x512xf32> to vector<16x256xf32>
    %c0_13 = arith.constant 0 : index
    %c0_14 = arith.constant 0 : index
    %c0_15 = arith.constant 0 : index
    %24 = vector.load %arg8[%c0_13, %c0_14, %c0_15] : memref<2x16x256xf32, #tpu.memory_space<vmem>>, vector<1x16x256xf32>
    %25 = vector.shape_cast %24 : vector<1x16x256xf32> to vector<16x256xf32>
    %26 = vector.shape_cast %23 : vector<16x256xf32> to vector<1x16x256xf32>
    tpu.vector_store %arg8[%c0_13, %c0_14, %c0_15], %26 {strides = array<i32>} : memref<2x16x256xf32, #tpu.memory_space<vmem>>, vector<1x16x256xf32>,
    %cst_16 = arith.constant dense<0.000000e+00> : vector<16xf32>
    %27 = vector.multi_reduction <add>, %23, %cst_16 [1] : vector<16x256xf32> to vector<16xf32>
    %c0_17 = arith.constant 0 : index
    %c0_18 = arith.constant 0 : index
    %28 = vector.load %arg9[%c0_17, %c0_18] : memref<2x16xf32, #tpu.memory_space<vmem>>, vector<1x16xf32>
    %29 = vector.shape_cast %28 : vector<1x16xf32> to vector<16xf32>
    %30 = vector.shape_cast %27 : vector<16xf32> to vector<1x16xf32>
    tpu.vector_store %arg9[%c0_17, %c0_18], %30 {strides = array<i32>} : memref<2x16xf32, #tpu.memory_space<vmem>>, vector<1x16xf32>,
    %31 = vector.extract_strided_slice %22 {offsets = [0, 256], sizes = [16, 256], strides = [1, 1]} : vector<16x512xf32> to vector<16x256xf32>
    %c1 = arith.constant 1 : index
    %c0_19 = arith.constant 0 : index
    %c0_20 = arith.constant 0 : index
    %32 = vector.load %arg8[%c1, %c0_19, %c0_20] : memref<2x16x256xf32, #tpu.memory_space<vmem>>, vector<1x16x256xf32>
    %33 = vector.shape_cast %32 : vector<1x16x256xf32> to vector<16x256xf32>
    %34 = vector.shape_cast %31 : vector<16x256xf32> to vector<1x16x256xf32>
    tpu.vector_store %arg8[%c1, %c0_19, %c0_20], %34 {strides = array<i32>} : memref<2x16x256xf32, #tpu.memory_space<vmem>>, vector<1x16x256xf32>,
    %cst_21 = arith.constant dense<0.000000e+00> : vector<16xf32>
    %35 = vector.multi_reduction <add>, %31, %cst_21 [1] : vector<16x256xf32> to vector<16xf32>
    %c1_22 = arith.constant 1 : index
    %c0_23 = arith.constant 0 : index
    %36 = vector.load %arg9[%c1_22, %c0_23] : memref<2x16xf32, #tpu.memory_space<vmem>>, vector<1x16xf32>
    %37 = vector.shape_cast %36 : vector<1x16xf32> to vector<16xf32>
    %38 = vector.shape_cast %35 : vector<16xf32> to vector<1x16xf32>
    tpu.vector_store %arg9[%c1_22, %c0_23], %38 {strides = array<i32>} : memref<2x16xf32, #tpu.memory_space<vmem>>, vector<1x16xf32>,
    %c0_24 = arith.constant 0 : index
    %c0_25 = arith.constant 0 : index
    %39 = vector.load %arg9[%c0_24, %c0_25] : memref<2x16xf32, #tpu.memory_space<vmem>>, vector<2x16xf32>
    %40 = math.roundeven %39 : vector<2x16xf32>
    %cst_26 = arith.constant 0.000000e+00 : f32
    %cst_27 = arith.constant 3.000000e+00 : f32
    %41 = vector.broadcast %cst_26 : f32 to vector<2x16xf32>
    %42 = arith.maximumf %41, %40 : vector<2x16xf32>
    %43 = vector.broadcast %cst_27 : f32 to vector<2x16xf32>
    %44 = arith.minimumf %43, %42 : vector<2x16xf32>
    %c0_28 = arith.constant 0 : index
    %c0_29 = arith.constant 0 : index
    %45 = vector.load %arg6[%c0_28, %c0_29] : memref<16x3xf32, #tpu.memory_space<vmem>>, vector<16x3xf32>
    %cst_30 = arith.constant dense<0.000000e+00> : vector<2x3xf32>
    %46 = tpu.matmul %44, %45, %cst_30 {dimension_numbers = #tpu.dot_dimension_numbers<[1], [0], [0], [1], [0, 0, 1, 1], [], []>} : vector<2x16xf32>, vector<16x3xf32>, vector<2x3xf32> -> vector<2x3xf32>
    %c0_31 = arith.constant 0 : index
    %c0_32 = arith.constant 0 : index
    %47 = vector.load %arg7[%c0_31, %c0_32] : memref<1x3xf32, #tpu.memory_space<vmem>>, vector<1x3xf32>
    %48 = vector.broadcast %47 : vector<1x3xf32> to vector<2x3xf32>
    %49 = arith.addf %46, %48 : vector<2x3xf32>
    %c0_33 = arith.constant 0 : index
    %c0_34 = arith.constant 0 : index
    %50 = vector.load %arg10[%c0_33, %c0_34] : memref<2x3xf32, #tpu.memory_space<vmem>>, vector<2x3xf32>
    tpu.vector_store %arg10[%c0_33, %c0_34], %49 {strides = array<i32>} : memref<2x3xf32, #tpu.memory_space<vmem>>, vector<2x3xf32>,
    return
  }
  func.func @transform_0(%arg0: i32) -> (i32, i32) {
    %c0_i32 = arith.constant 0 : i32
    %c0_i32_0 = arith.constant 0 : i32
    return %c0_i32, %arg0 : i32, i32
  }
  func.func @transform_1(%arg0: i32) -> (i32, i32) {
    %c0_i32 = arith.constant 0 : i32
    %c0_i32_0 = arith.constant 0 : i32
    %c0_i32_1 = arith.constant 0 : i32
    return %c0_i32, %c0_i32_0 : i32, i32
  }
  func.func @transform_2(%arg0: i32) -> (i32, i32) {
    %c0_i32 = arith.constant 0 : i32
    %c0_i32_0 = arith.constant 0 : i32
    %c0_i32_1 = arith.constant 0 : i32
    return %c0_i32, %c0_i32_0 : i32, i32
  }
  func.func @transform_3(%arg0: i32) -> (i32, i32) {
    %c0_i32 = arith.constant 0 : i32
    %c0_i32_0 = arith.constant 0 : i32
    %c0_i32_1 = arith.constant 0 : i32
    return %c0_i32, %c0_i32_0 : i32, i32
  }
  func.func @transform_4(%arg0: i32) -> (i32, i32) {
    %c0_i32 = arith.constant 0 : i32
    %c0_i32_0 = arith.constant 0 : i32
    %c0_i32_1 = arith.constant 0 : i32
    return %c0_i32, %c0_i32_0 : i32, i32
  }
  func.func @transform_5(%arg0: i32) -> (i32, i32) {
    %c0_i32 = arith.constant 0 : i32
    %c0_i32_0 = arith.constant 0 : i32
    %c0_i32_1 = arith.constant 0 : i32
    return %c0_i32, %c0_i32_0 : i32, i32
  }
  func.func @transform_6(%arg0: i32) -> (i32, i32) {
    %c0_i32 = arith.constant 0 : i32
    %c0_i32_0 = arith.constant 0 : i32
    %c0_i32_1 = arith.constant 0 : i32
    return %c0_i32, %c0_i32_0 : i32, i32
  }
  func.func @transform_7(%arg0: i32) -> (i32, i32, i32) {
    %c0_i32 = arith.constant 0 : i32
    %c0_i32_0 = arith.constant 0 : i32
    %c0_i32_1 = arith.constant 0 : i32
    return %arg0, %c0_i32, %c0_i32_0 : i32, i32, i32
  }
  func.func @transform_8(%arg0: i32) -> (i32, i32) {
    %c0_i32 = arith.constant 0 : i32
    %c0_i32_0 = arith.constant 0 : i32
    return %arg0, %c0_i32 : i32, i32
  }
  func.func @transform_9(%arg0: i32) -> (i32, i32) {
    %c0_i32 = arith.constant 0 : i32
    %c0_i32_0 = arith.constant 0 : i32
    return %arg0, %c0_i32 : i32, i32
  }
}

</mosaic_0001>

<llo_original>
// kernel: tpu_custom_call.1
$region0: #{tpu_custom_call.1}
  #allocation0 [shape = 'u32[]', space=smem, size = 0x4, offset = 0x4, fixed_abs, tag = 'smem constant byte address 0x4 - core index']
  #allocation1 [shape = 'u32[144,128]{1,0:T(1,128)}', space=vmem, size = 0x12000, scoped, tag = 'internal scratch']
  %s0 = inlined_call_operand.vmem [shape: f32[8,512], index: 0, kind: input, shape index: {}]
  %s1 = inlined_call_operand.vmem [shape: f32[32,8], index: 1, kind: input, shape index: {}]
  %s2 = inlined_call_operand.vmem [shape: f32[32,1], index: 2, kind: input, shape index: {}]
  %s3 = inlined_call_operand.vmem [shape: f32[16,32], index: 3, kind: input, shape index: {}]
  %s4 = inlined_call_operand.vmem [shape: f32[16,1], index: 4, kind: input, shape index: {}]
  %s5 = inlined_call_operand.vmem [shape: f32[16,3], index: 5, kind: input, shape index: {}]
  %s6 = inlined_call_operand.vmem [shape: f32[1,3], index: 6, kind: input, shape index: {}]
  %s7 = inlined_call_operand.hbm [shape: f32[2,16,256], index: 7, kind: output, shape index: {0}]
  %s8 = inlined_call_operand.hbm [shape: f32[2,16], index: 8, kind: output, shape index: {1}]
  %s9 = inlined_call_operand.hbm [shape: f32[2,3], index: 9, kind: output, shape index: {2}]
  %10 = xla_tuple %s7, %s8, %s9
  %s11 = sld [smem:[#allocation0]]
  $region54: #{tpu_custom_call.1} parent=0
    _
  %s13 = ssub.s32 1, %s11
  %s14 = scalar_select 0, %s13, %s11
  $region1: #{tpu_custom_call.1} parent=0
    #allocation2 [shape = 'u8[32768]{0}', space=vmem, size = 0x8000, scoped, tag = 'output window, operand 0, single buffered']
    #allocation3 [shape = 's32[1]{0}', space=sflag, size = 0x4, scoped, tag = 'scoped memory for tpu_custom_call.1']
    #allocation4 [shape = 'u8[1024]{0}', space=vmem, size = 0x400, scoped, tag = 'output window, operand 1, single buffered']
    #allocation5 [shape = 's32[1]{0}', space=sflag, size = 0x4, scoped, tag = 'scoped memory for tpu_custom_call.1']
    #allocation6 [shape = 'u8[1024]{0}', space=vmem, size = 0x400, scoped, tag = 'output window, operand 2, single buffered']
    %15 = vsyncpa [#allocation3], 0
    %16 = vsyncpa [#allocation5], 0
    // Predicated region
    $region2: #{tpu_custom_call.1} parent=1 // pred_check
      _
    $region3: #{tpu_custom_call.1} parent=1 // pred_check_branch
      %18 = sbr.rel (0) target = $region5
    $region4: #{tpu_custom_call.1} parent=1 // pred_region
      _
    $region5: #{tpu_custom_call.1} parent=1 // pred_fallthru
      _
    // Predicated region
    $region6: #{tpu_custom_call.1} parent=1 // pred_check
      _
    $region7: #{tpu_custom_call.1} parent=1 // pred_check_branch
      %20 = sbr.rel (0) target = $region9
    $region8: #{tpu_custom_call.1} parent=1 // pred_region
      _
    $region9: #{tpu_custom_call.1} parent=1 // pred_fallthru
      _
    // Predicated region
    $region10: #{tpu_custom_call.1} parent=1 // pred_check
      _
    $region11: #{tpu_custom_call.1} parent=1 // pred_check_branch
      %22 = sbr.rel (0) target = $region13
    $region12: #{tpu_custom_call.1} parent=1 // pred_region
      _
    $region13: #{tpu_custom_call.1} parent=1 // pred_fallthru
      _
    // Predicated region
    $region14: #{tpu_custom_call.1} parent=1 // pred_check
      _
    $region15: #{tpu_custom_call.1} parent=1 // pred_check_branch
      %24 = sbr.rel (0) target = $region17
    $region16: #{tpu_custom_call.1} parent=1 // pred_region
      _
    $region17: #{tpu_custom_call.1} parent=1 // pred_fallthru
      _
    // Predicated region
    $region18: #{tpu_custom_call.1} parent=1 // pred_check
      _
    $region19: #{tpu_custom_call.1} parent=1 // pred_check_branch
      %26 = sbr.rel (0) target = $region21
    $region20: #{tpu_custom_call.1} parent=1 // pred_region
      _
    $region21: #{tpu_custom_call.1} parent=1 // pred_fallthru
      _
    // Predicated region
    $region22: #{tpu_custom_call.1} parent=1 // pred_check
      _
    $region23: #{tpu_custom_call.1} parent=1 // pred_check_branch
      %28 = sbr.rel (0) target = $region25
    $region24: #{tpu_custom_call.1} parent=1 // pred_region
      _
    $region25: #{tpu_custom_call.1} parent=1 // pred_fallthru
      _
    // Predicated region
    $region26: #{tpu_custom_call.1} parent=1 // pred_check
      _
    $region27: #{tpu_custom_call.1} parent=1 // pred_check_branch
      %30 = sbr.rel (0) target = $region29
    $region28: #{tpu_custom_call.1} parent=1 // pred_region
      _
    $region29: #{tpu_custom_call.1} parent=1 // pred_fallthru
      _
    %v31 = vld [vmem:[%s0] sm:$0xff]
    %v32 = vld [vmem:[%s0 + $0x8] sm:$0xff]
    %v33 = vld [vmem:[%s0 + $0x10] sm:$0xff]
    %v34 = vld [vmem:[%s0 + $0x18] sm:$0xff]
    %v35 = vld [vmem:[%s1] sm:$0xff]
    %v36 = vld [vmem:[%s1 + $0x8] sm:$0xff]
    %v37 = vld [vmem:[%s1 + $0x10] sm:$0xff]
    %v38 = vld [vmem:[%s1 + $0x18] sm:$0xff]
    %v39 = vld [vmem:[%s3] sm:$0xff]
    %v40 = vld [vmem:[%s3 + $0x8] sm:$0xff]
    %v41 = vld [vmem:[%s2] sm:$0xff]
    %v42 = vld [vmem:[%s2 + $0x8] sm:$0xff]
    %v43 = vld [vmem:[%s2 + $0x10] sm:$0xff]
    %v44 = vld [vmem:[%s2 + $0x18] sm:$0xff]
    %46 = vset.pattern.permute.xlu0 0
    %47 = vperm.xlu0 %46, %v41
    %v48 = vpop.permute.xlu0 %47
    %51 = vset.pattern.permute.xlu0 0
    %52 = vperm.xlu0 %51, %v42
    %v53 = vpop.permute.xlu0 %52
    %56 = vset.pattern.permute.xlu0 0
    %57 = vperm.xlu0 %56, %v43
    %v58 = vpop.permute.xlu0 %57
    %61 = vset.pattern.permute.xlu0 0
    %62 = vperm.xlu0 %61, %v44
    %v63 = vpop.permute.xlu0 %62
    %vm65 = vcmask 64512
    %v67 = vsel %vm65, %v35, 0
    %v70 = vsel %vm65, %v36, 0
    %v73 = vsel %vm65, %v37, 0
    %v76 = vsel %vm65, %v38, 0
    %78 = vmatprep.subr.mxu0 %v32
    %79 = vmatpush1.msra.mxu0 %v31
    %80 = vmatprep.subr.mxu0 0.0
    %81 = vmatpush1.msra.mxu0 0.0
    %82 = vmatprep.subr.mxu0 0.0
    %83 = vmatpush1.msra.mxu0 0.0
    %84 = vmatprep.subr.mxu0 0.0
    %85 = vmatpush1.msra.mxu0 0.0
    %86 = vmatprep.subr.mxu0 0.0
    %87 = vmatpush1.msra.mxu0 0.0
    %88 = vmatprep.subr.mxu0 0.0
    %89 = vmatpush1.msra.mxu0 0.0
    %90 = vmatprep.subr.mxu0 0.0
    %91 = vmatpush1.msra.mxu0 0.0
    %92 = vmatprep.subr.mxu0 0.0
    %93 = vmatpush1.msra.mxu0 0.0
    %94 = vmatprep.subr.mxu0 0.0
    %95 = vmatpush1.msra.mxu0 0.0
    %96 = vmatprep.subr.mxu0 0.0
    %97 = vmatpush1.msra.mxu0 0.0
    %98 = vmatprep.subr.mxu0 0.0
    %99 = vmatpush1.msra.mxu0 0.0
    %100 = vmatprep.subr.mxu0 0.0
    %101 = vmatpush1.msra.mxu0 0.0
    %102 = vmatprep.subr.mxu0 0.0
    %103 = vmatpush1.msra.mxu0 0.0
    %104 = vmatprep.subr.mxu0 0.0
    %105 = vmatpush1.msra.mxu0 0.0
    %106 = vmatprep.subr.mxu0 0.0
    %107 = vmatpush1.msra.mxu0 0.0
    %108 = vmatprep.subr.mxu0 0.0
    %109 = vmatpush1.msra.mxu0 0.0
    %110 = vmatprep.subr.mxu0 0.0
    %111 = vmatpush1.msra.mxu0 0.0
    %112 = vmatprep.subr.mxu0 0.0
    %113 = vmatpush1.msra.mxu0 0.0
    %114 = vmatprep.subr.mxu0 0.0
    %115 = vmatpush1.msra.mxu0 0.0
    %116 = vmatprep.subr.mxu0 0.0
    %117 = vmatpush1.msra.mxu0 0.0
    %118 = vmatprep.subr.mxu0 0.0
    %119 = vmatpush1.msra.mxu0 0.0
    %120 = vmatprep.subr.mxu0 0.0
    %121 = vmatpush1.msra.mxu0 0.0
    %122 = vmatprep.subr.mxu0 0.0
    %123 = vmatpush1.msra.mxu0 0.0
    %124 = vmatprep.subr.mxu0 0.0
    %125 = vmatpush1.msra.mxu0 0.0
    %126 = vmatprep.subr.mxu0 0.0
    %127 = vmatpush1.msra.mxu0 0.0
    %128 = vmatprep.subr.mxu0 0.0
    %129 = vmatpush1.msra.mxu0 0.0
    %130 = vmatprep.subr.mxu0 0.0
    %131 = vmatpush1.msra.mxu0 0.0
    %132 = vmatprep.subr.mxu0 0.0
    %133 = vmatpush1.msra.mxu0 0.0
    %134 = vmatprep.subr.mxu0 0.0
    %135 = vmatpush1.msra.mxu0 0.0
    %136 = vmatprep.subr.mxu0 0.0
    %137 = vmatpush1.msra.mxu0 0.0
    %138 = vmatprep.subr.mxu0 0.0
    %139 = vmatpush1.msra.mxu0 0.0
    %140 = vmatprep.subr.mxu0 0.0
    %141 = vmatpush1.msra.mxu0 0.0
    %142 = vmatprep.mubr.f32.mxu0 0.0
    %143 = vmatmul.mubr.f32.gmra.mrb[0].mxu0 %v67
    %v144 = vpop.f32.mrb[0].mxu0
    %v145 = vadd.f32 %v48, %v144
    %v146 = vpop.f32.mrb[0].mxu0
    %v147 = vadd.f32 %v48, %v146
    %148 = vmatprep.mubr.f32.mxu0 0.0
    %149 = vmatmul.mubr.f32.gmra.mrb[0].mxu0 %v70
    %v150 = vpop.f32.mrb[0].mxu0
    %v151 = vadd.f32 %v53, %v150
    %v152 = vpop.f32.mrb[0].mxu0
    %v153 = vadd.f32 %v53, %v152
    %154 = vmatprep.mubr.f32.mxu0 0.0
    %155 = vmatmul.mubr.f32.gmra.mrb[0].mxu0 %v73
    %v156 = vpop.f32.mrb[0].mxu0
    %v157 = vadd.f32 %v58, %v156
    %v158 = vpop.f32.mrb[0].mxu0
    %v159 = vadd.f32 %v58, %v158
    %160 = vmatprep.mubr.f32.mxu0 0.0
    %161 = vmatmul.mubr.f32.gmra.mrb[0].mxu0 %v76
    %v162 = vpop.f32.mrb[0].mxu0
    %v163 = vadd.f32 %v63, %v162
    %v164 = vpop.f32.mrb[0].mxu0
    %v165 = vadd.f32 %v63, %v164
    %166 = vdwg.mxu0
    %167 = vmatprep.subr.mxu0 %v34
    %168 = vmatpush1.msra.mxu0 %v33
    %169 = vmatprep.subr.mxu0 0.0
    %170 = vmatpush1.msra.mxu0 0.0
    %171 = vmatprep.subr.mxu0 0.0
    %172 = vmatpush1.msra.mxu0 0.0
    %173 = vmatprep.subr.mxu0 0.0
    %174 = vmatpush1.msra.mxu0 0.0
    %175 = vmatprep.subr.mxu0 0.0
    %176 = vmatpush1.msra.mxu0 0.0
    %177 = vmatprep.subr.mxu0 0.0
    %178 = vmatpush1.msra.mxu0 0.0
    %179 = vmatprep.subr.mxu0 0.0
    %180 = vmatpush1.msra.mxu0 0.0
    %181 = vmatprep.subr.mxu0 0.0
    %182 = vmatpush1.msra.mxu0 0.0
    %183 = vmatprep.subr.mxu0 0.0
    %184 = vmatpush1.msra.mxu0 0.0
    %185 = vmatprep.subr.mxu0 0.0
    %186 = vmatpush1.msra.mxu0 0.0
    %187 = vmatprep.subr.mxu0 0.0
    %188 = vmatpush1.msra.mxu0 0.0
    %189 = vmatprep.subr.mxu0 0.0
    %190 = vmatpush1.msra.mxu0 0.0
    %191 = vmatprep.subr.mxu0 0.0
    %192 = vmatpush1.msra.mxu0 0.0
    %193 = vmatprep.subr.mxu0 0.0
    %194 = vmatpush1.msra.mxu0 0.0
    %195 = vmatprep.subr.mxu0 0.0
    %196 = vmatpush1.msra.mxu0 0.0
    %197 = vmatprep.subr.mxu0 0.0
    %198 = vmatpush1.msra.mxu0 0.0
    %199 = vmatprep.subr.mxu0 0.0
    %200 = vmatpush1.msra.mxu0 0.0
    %201 = vmatprep.subr.mxu0 0.0
    %202 = vmatpush1.msra.mxu0 0.0
    %203 = vmatprep.subr.mxu0 0.0
    %204 = vmatpush1.msra.mxu0 0.0
    %205 = vmatprep.subr.mxu0 0.0
    %206 = vmatpush1.msra.mxu0 0.0
    %207 = vmatprep.subr.mxu0 0.0
    %208 = vmatpush1.msra.mxu0 0.0
    %209 = vmatprep.subr.mxu0 0.0
    %210 = vmatpush1.msra.mxu0 0.0
    %211 = vmatprep.subr.mxu0 0.0
    %212 = vmatpush1.msra.mxu0 0.0
    %213 = vmatprep.subr.mxu0 0.0
    %214 = vmatpush1.msra.mxu0 0.0
    %215 = vmatprep.subr.mxu0 0.0
    %216 = vmatpush1.msra.mxu0 0.0
    %217 = vmatprep.subr.mxu0 0.0
    %218 = vmatpush1.msra.mxu0 0.0
    %219 = vmatprep.subr.mxu0 0.0
    %220 = vmatpush1.msra.mxu0 0.0
    %221 = vmatprep.subr.mxu0 0.0
    %222 = vmatpush1.msra.mxu0 0.0
    %223 = vmatprep.subr.mxu0 0.0
    %224 = vmatpush1.msra.mxu0 0.0
    %225 = vmatprep.subr.mxu0 0.0
    %226 = vmatpush1.msra.mxu0 0.0
    %227 = vmatprep.subr.mxu0 0.0
    %228 = vmatpush1.msra.mxu0 0.0
    %229 = vmatprep.subr.mxu0 0.0
    %230 = vmatpush1.msra.mxu0 0.0
    %231 = vmatprep.mubr.f32.mxu0 0.0
    %232 = vmatmul.mubr.f32.gmra.mrb[0].mxu0 %v67
    %v233 = vpop.f32.mrb[0].mxu0
    %v234 = vadd.f32 %v48, %v233
    %v235 = vpop.f32.mrb[0].mxu0
    %v236 = vadd.f32 %v48, %v235
    %237 = vmatprep.mubr.f32.mxu0 0.0
    %238 = vmatmul.mubr.f32.gmra.mrb[0].mxu0 %v70
    %v239 = vpop.f32.mrb[0].mxu0
    %v240 = vadd.f32 %v53, %v239
    %v241 = vpop.f32.mrb[0].mxu0
    %v242 = vadd.f32 %v53, %v241
    %243 = vmatprep.mubr.f32.mxu0 0.0
    %244 = vmatmul.mubr.f32.gmra.mrb[0].mxu0 %v73
    %v245 = vpop.f32.mrb[0].mxu0
    %v246 = vadd.f32 %v58, %v245
    %v247 = vpop.f32.mrb[0].mxu0
    %v248 = vadd.f32 %v58, %v247
    %249 = vmatprep.mubr.f32.mxu0 0.0
    %250 = vmatmul.mubr.f32.gmra.mrb[0].mxu0 %v76
    %v251 = vpop.f32.mrb[0].mxu0
    %v252 = vadd.f32 %v63, %v251
    %v253 = vpop.f32.mrb[0].mxu0
    %v254 = vadd.f32 %v63, %v253
    %255 = vdwg.mxu0
    %v256 = vmax.f32 %v145, 0.0
    %v257 = vmax.f32 %v147, 0.0
    %v258 = vmax.f32 %v234, 0.0
    %v259 = vmax.f32 %v236, 0.0
    %v260 = vmax.f32 %v151, 0.0
    %v261 = vmax.f32 %v153, 0.0
    %v262 = vmax.f32 %v240, 0.0
    %v263 = vmax.f32 %v242, 0.0
    %v264 = vmax.f32 %v157, 0.0
    %v265 = vmax.f32 %v159, 0.0
    %v266 = vmax.f32 %v246, 0.0
    %v267 = vmax.f32 %v248, 0.0
    %v268 = vmax.f32 %v163, 0.0
    %v269 = vmax.f32 %v165, 0.0
    %v270 = vmax.f32 %v252, 0.0
    %v271 = vmax.f32 %v254, 0.0
    %v272 = vld [vmem:[%s4] sm:$0xff]
    %v273 = vld [vmem:[%s4 + $0x8] sm:$0xff]
    %275 = vset.pattern.permute.xlu0 0
    %276 = vperm.xlu0 %275, %v272
    %v277 = vpop.permute.xlu0 %276
    %280 = vset.pattern.permute.xlu0 0
    %281 = vperm.xlu0 %280, %v273
    %v282 = vpop.permute.xlu0 %281
    %vm284 = vcmask 261120
    %v286 = vsel %vm284, %v39, 0
    %v289 = vsel %vm284, %v40, 0
    %291 = vmatprep.subr.mxu0 %v257
    %292 = vmatpush1.msra.mxu0 %v256
    %293 = vmatprep.subr.mxu0 %v261
    %294 = vmatpush1.msra.mxu0 %v260
    %295 = vmatprep.subr.mxu0 %v265
    %296 = vmatpush1.msra.mxu0 %v264
    %297 = vmatprep.subr.mxu0 %v269
    %298 = vmatpush1.msra.mxu0 %v268
    %299 = vmatprep.subr.mxu0 0.0
    %300 = vmatpush1.msra.mxu0 0.0
    %301 = vmatprep.subr.mxu0 0.0
    %302 = vmatpush1.msra.mxu0 0.0
    %303 = vmatprep.subr.mxu0 0.0
    %304 = vmatpush1.msra.mxu0 0.0
    %305 = vmatprep.subr.mxu0 0.0
    %306 = vmatpush1.msra.mxu0 0.0
    %307 = vmatprep.subr.mxu0 0.0
    %308 = vmatpush1.msra.mxu0 0.0
    %309 = vmatprep.subr.mxu0 0.0
    %310 = vmatpush1.msra.mxu0 0.0
    %311 = vmatprep.subr.mxu0 0.0
    %312 = vmatpush1.msra.mxu0 0.0
    %313 = vmatprep.subr.mxu0 0.0
    %314 = vmatpush1.msra.mxu0 0.0
    %315 = vmatprep.subr.mxu0 0.0
    %316 = vmatpush1.msra.mxu0 0.0
    %317 = vmatprep.subr.mxu0 0.0
    %318 = vmatpush1.msra.mxu0 0.0
    %319 = vmatprep.subr.mxu0 0.0
    %320 = vmatpush1.msra.mxu0 0.0
    %321 = vmatprep.subr.mxu0 0.0
    %322 = vmatpush1.msra.mxu0 0.0
    %323 = vmatprep.subr.mxu0 0.0
    %324 = vmatpush1.msra.mxu0 0.0
    %325 = vmatprep.subr.mxu0 0.0
    %326 = vmatpush1.msra.mxu0 0.0
    %327 = vmatprep.subr.mxu0 0.0
    %328 = vmatpush1.msra.mxu0 0.0
    %329 = vmatprep.subr.mxu0 0.0
    %330 = vmatpush1.msra.mxu0 0.0
    %331 = vmatprep.subr.mxu0 0.0
    %332 = vmatpush1.msra.mxu0 0.0
    %333 = vmatprep.subr.mxu0 0.0
    %334 = vmatpush1.msra.mxu0 0.0
    %335 = vmatprep.subr.mxu0 0.0
    %336 = vmatpush1.msra.mxu0 0.0
    %337 = vmatprep.subr.mxu0 0.0
    %338 = vmatpush1.msra.mxu0 0.0
    %339 = vmatprep.subr.mxu0 0.0
    %340 = vmatpush1.msra.mxu0 0.0
    %341 = vmatprep.subr.mxu0 0.0
    %342 = vmatpush1.msra.mxu0 0.0
    %343 = vmatprep.subr.mxu0 0.0
    %344 = vmatpush1.msra.mxu0 0.0
    %345 = vmatprep.subr.mxu0 0.0
    %346 = vmatpush1.msra.mxu0 0.0
    %347 = vmatprep.subr.mxu0 0.0
    %348 = vmatpush1.msra.mxu0 0.0
    %349 = vmatprep.subr.mxu0 0.0
    %350 = vmatpush1.msra.mxu0 0.0
    %351 = vmatprep.subr.mxu0 0.0
    %352 = vmatpush1.msra.mxu0 0.0
    %353 = vmatprep.subr.mxu0 0.0
    %354 = vmatpush1.msra.mxu0 0.0
    %355 = vmatprep.mubr.f32.mxu0 0.0
    %356 = vmatmul.mubr.f32.gmra.mrb[0].mxu0 %v286
    %v357 = vpop.f32.mrb[0].mxu0
    %v358 = vadd.f32 %v277, %v357
    %v359 = vpop.f32.mrb[0].mxu0
    %v360 = vadd.f32 %v277, %v359
    %361 = vmatprep.mubr.f32.mxu0 0.0
    %362 = vmatmul.mubr.f32.gmra.mrb[0].mxu0 %v289
    %v363 = vpop.f32.mrb[0].mxu0
    %v364 = vadd.f32 %v282, %v363
    %v365 = vpop.f32.mrb[0].mxu0
    %v366 = vadd.f32 %v282, %v365
    %367 = vdwg.mxu0
    %368 = vmatprep.subr.mxu0 %v259
    %369 = vmatpush1.msra.mxu0 %v258
    %370 = vmatprep.subr.mxu0 %v263
    %371 = vmatpush1.msra.mxu0 %v262
    %372 = vmatprep.subr.mxu0 %v267
    %373 = vmatpush1.msra.mxu0 %v266
    %374 = vmatprep.subr.mxu0 %v271
    %375 = vmatpush1.msra.mxu0 %v270
    %376 = vmatprep.subr.mxu0 0.0
    %377 = vmatpush1.msra.mxu0 0.0
    %378 = vmatprep.subr.mxu0 0.0
    %379 = vmatpush1.msra.mxu0 0.0
    %380 = vmatprep.subr.mxu0 0.0
    %381 = vmatpush1.msra.mxu0 0.0
    %382 = vmatprep.subr.mxu0 0.0
    %383 = vmatpush1.msra.mxu0 0.0
    %384 = vmatprep.subr.mxu0 0.0
    %385 = vmatpush1.msra.mxu0 0.0
    %386 = vmatprep.subr.mxu0 0.0
    %387 = vmatpush1.msra.mxu0 0.0
    %388 = vmatprep.subr.mxu0 0.0
    %389 = vmatpush1.msra.mxu0 0.0
    %390 = vmatprep.subr.mxu0 0.0
    %391 = vmatpush1.msra.mxu0 0.0
    %392 = vmatprep.subr.mxu0 0.0
    %393 = vmatpush1.msra.mxu0 0.0
    %394 = vmatprep.subr.mxu0 0.0
    %395 = vmatpush1.msra.mxu0 0.0
    %396 = vmatprep.subr.mxu0 0.0
    %397 = vmatpush1.msra.mxu0 0.0
    %398 = vmatprep.subr.mxu0 0.0
    %399 = vmatpush1.msra.mxu0 0.0
    %400 = vmatprep.subr.mxu0 0.0
    %401 = vmatpush1.msra.mxu0 0.0
    %402 = vmatprep.subr.mxu0 0.0
    %403 = vmatpush1.msra.mxu0 0.0
    %404 = vmatprep.subr.mxu0 0.0
    %405 = vmatpush1.msra.mxu0 0.0
    %406 = vmatprep.subr.mxu0 0.0
    %407 = vmatpush1.msra.mxu0 0.0
    %408 = vmatprep.subr.mxu0 0.0
    %409 = vmatpush1.msra.mxu0 0.0
    %410 = vmatprep.subr.mxu0 0.0
    %411 = vmatpush1.msra.mxu0 0.0
    %412 = vmatprep.subr.mxu0 0.0
    %413 = vmatpush1.msra.mxu0 0.0
    %414 = vmatprep.subr.mxu0 0.0
    %415 = vmatpush1.msra.mxu0 0.0
    %416 = vmatprep.subr.mxu0 0.0
    %417 = vmatpush1.msra.mxu0 0.0
    %418 = vmatprep.subr.mxu0 0.0
    %419 = vmatpush1.msra.mxu0 0.0
    %420 = vmatprep.subr.mxu0 0.0
    %421 = vmatpush1.msra.mxu0 0.0
    %422 = vmatprep.subr.mxu0 0.0
    %423 = vmatpush1.msra.mxu0 0.0
    %424 = vmatprep.subr.mxu0 0.0
    %425 = vmatpush1.msra.mxu0 0.0
    %426 = vmatprep.subr.mxu0 0.0
    %427 = vmatpush1.msra.mxu0 0.0
    %428 = vmatprep.subr.mxu0 0.0
    %429 = vmatpush1.msra.mxu0 0.0
    %430 = vmatprep.subr.mxu0 0.0
    %431 = vmatpush1.msra.mxu0 0.0
    %432 = vmatprep.mubr.f32.mxu0 0.0
    %433 = vmatmul.mubr.f32.gmra.mrb[0].mxu0 %v286
    %v434 = vpop.f32.mrb[0].mxu0
    %v435 = vadd.f32 %v277, %v434
    %v436 = vpop.f32.mrb[0].mxu0
    %v437 = vadd.f32 %v277, %v436
    %438 = vmatprep.mubr.f32.mxu0 0.0
    %439 = vmatmul.mubr.f32.gmra.mrb[0].mxu0 %v289
    %v440 = vpop.f32.mrb[0].mxu0
    %v441 = vadd.f32 %v282, %v440
    %v442 = vpop.f32.mrb[0].mxu0
    %v443 = vadd.f32 %v282, %v442
    %444 = vdwg.mxu0
    %v445 = vmax.f32 %v358, %v364
    %v446 = vrot.slane %v445, 4
    %v447 = vmax.f32 %v445, %v446
    %v448 = vrot.slane %v447, 2
    %v449 = vmax.f32 %v447, %v448
    %v450 = vrot.slane %v449, 1
    %v451 = vmax.f32 %v449, %v450
    %v452 = vmax.f32 %v360, %v366
    %v453 = vrot.slane %v452, 4
    %v454 = vmax.f32 %v452, %v453
    %v455 = vrot.slane %v454, 2
    %v456 = vmax.f32 %v454, %v455
    %v457 = vrot.slane %v456, 1
    %v458 = vmax.f32 %v456, %v457
    %v459 = vmax.f32 %v435, %v441
    %v460 = vrot.slane %v459, 4
    %v461 = vmax.f32 %v459, %v460
    %v462 = vrot.slane %v461, 2
    %v463 = vmax.f32 %v461, %v462
    %v464 = vrot.slane %v463, 1
    %v465 = vmax.f32 %v463, %v464
    %v466 = vmax.f32 %v437, %v443
    %v467 = vrot.slane %v466, 4
    %v468 = vmax.f32 %v466, %v467
    %v469 = vrot.slane %v468, 2
    %v470 = vmax.f32 %v468, %v469
    %v471 = vrot.slane %v470, 1
    %v472 = vmax.f32 %v470, %v471
    %v473 = vsub.f32 %v358, %v451
    %v474 = vsub.f32 %v360, %v458
    %v475 = vsub.f32 %v435, %v465
    %v476 = vsub.f32 %v437, %v472
    %v477 = vsub.f32 %v364, %v451
    %v478 = vsub.f32 %v366, %v458
    %v479 = vsub.f32 %v441, %v465
    %v480 = vsub.f32 %v443, %v472
    %v481 = vmul.f32 %v473, 1.442695
    %v482 = vpow.pop %v481
    %v483 = vmul.f32 %v474, 1.442695
    %v484 = vpow.pop %v483
    %v485 = vmul.f32 %v475, 1.442695
    %v486 = vpow.pop %v485
    %v487 = vmul.f32 %v476, 1.442695
    %v488 = vpow.pop %v487
    %v489 = vmul.f32 %v477, 1.442695
    %v490 = vpow.pop %v489
    %v491 = vmul.f32 %v478, 1.442695
    %v492 = vpow.pop %v491
    %v493 = vmul.f32 %v479, 1.442695
    %v494 = vpow.pop %v493
    %v495 = vmul.f32 %v480, 1.442695
    %v496 = vpow.pop %v495
    %v497 = vadd.f32 %v482, %v490
    %v498 = vrot.slane %v497, 4
    %v499 = vadd.f32 %v497, %v498
    %v500 = vrot.slane %v499, 2
    %v501 = vadd.f32 %v499, %v500
    %v502 = vrot.slane %v501, 1
    %v503 = vadd.f32 %v501, %v502
    %v504 = vadd.f32 %v484, %v492
    %v505 = vrot.slane %v504, 4
    %v506 = vadd.f32 %v504, %v505
    %v507 = vrot.slane %v506, 2
    %v508 = vadd.f32 %v506, %v507
    %v509 = vrot.slane %v508, 1
    %v510 = vadd.f32 %v508, %v509
    %v511 = vadd.f32 %v486, %v494
    %v512 = vrot.slane %v511, 4
    %v513 = vadd.f32 %v511, %v512
    %v514 = vrot.slane %v513, 2
    %v515 = vadd.f32 %v513, %v514
    %v516 = vrot.slane %v515, 1
    %v517 = vadd.f32 %v515, %v516
    %v518 = vadd.f32 %v488, %v496
    %v519 = vrot.slane %v518, 4
    %v520 = vadd.f32 %v518, %v519
    %v521 = vrot.slane %v520, 2
    %v522 = vadd.f32 %v520, %v521
    %v523 = vrot.slane %v522, 1
    %v524 = vadd.f32 %v522, %v523
    %v525 = vrcp.pop %v503
    %v526 = vrcp.pop %v510
    %v527 = vrcp.pop %v517
    %v528 = vrcp.pop %v524
    %v529 = vmul.f32 %v482, %v525
    %v530 = vmul.f32 %v484, %v526
    %v531 = vmul.f32 %v486, %v527
    %v532 = vmul.f32 %v488, %v528
    %v533 = vmul.f32 %v490, %v525
    %v534 = vmul.f32 %v492, %v526
    %v535 = vmul.f32 %v494, %v527
    %v536 = vmul.f32 %v496, %v528
    %537 = vst [vmem:[#allocation2] sm:$0xff] %v529
    %538 = vst [vmem:[#allocation2 + $0x8] sm:$0xff] %v530
    %539 = vst [vmem:[#allocation2 + $0x10] sm:$0xff] %v533
    %540 = vst [vmem:[#allocation2 + $0x18] sm:$0xff] %v534
    %v541 = vadd.f32 %v529, %v530
    %542 = vadd.xlane.f32.xlu0 %v541
    %v543 = vpop.xlane.xlu0 %542
    %v544 = vadd.f32 %v533, %v534
    %545 = vadd.xlane.f32.xlu0 %v544
    %v546 = vpop.xlane.xlu0 %545
    %v549 = vlaneseq
    %v550 = vand.u32 %v549, 127
    %v551 = vlaneseq
    %v552 = vshrl.u32 %v551, 7
    %v553 = vsub.s32 %v550, %v552
    %v554 = vrot.slane %v543, %v553
    %v555 = vadd.s32 %v550, 4294967288
    %v556 = vlaneseq
    %v557 = vshrl.u32 %v556, 7
    %v558 = vsub.s32 %v555, %v557
    %v559 = vrot.slane %v546, %v558
    %vm560 = vcmask 130112
    %v561 = vsel %vm560, %v559, %v554
    %vm563 = vcmask 122880
    %564 = vst.msk [vmem:[#allocation4] sm:$0x1] %vm563, %v561
    %s565 = scalar_lea.vmem [#allocation2], 32
    %566 = vst [vmem:[%s565] sm:$0xff] %v531
    %567 = vst [vmem:[%s565 + $0x8] sm:$0xff] %v532
    %568 = vst [vmem:[%s565 + $0x10] sm:$0xff] %v535
    %569 = vst [vmem:[%s565 + $0x18] sm:$0xff] %v536
    %v570 = vadd.f32 %v531, %v532
    %571 = vadd.xlane.f32.xlu0 %v570
    %v572 = vpop.xlane.xlu0 %571
    %v573 = vadd.f32 %v535, %v536
    %574 = vadd.xlane.f32.xlu0 %v573
    %v575 = vpop.xlane.xlu0 %574
    %v578 = vlaneseq
    %v579 = vshrl.u32 %v578, 7
    %v580 = vsub.s32 %v550, %v579
    %v581 = vrot.slane %v572, %v580
    %v582 = vlaneseq
    %v583 = vshrl.u32 %v582, 7
    %v584 = vsub.s32 %v555, %v583
    %v585 = vrot.slane %v575, %v584
    %v586 = vsel %vm560, %v585, %v581
    %588 = vst.msk [vmem:[#allocation4 + $0x1] sm:$0x1] %vm563, %v586
    %v589 = vld [vmem:[#allocation4] sm:$0x3]
    %v590 = vround.ne.pseudo %v589
    %v591 = vmax.f32 %v590, 0.0
    %v592 = vmin.f32 %v591, 3.0
    %v593 = vld [vmem:[%s5] sm:$0xff]
    %v594 = vld [vmem:[%s5 + $0x8] sm:$0xff]
    %v595 = vld [vmem:[%s6] sm:$0x1]
    %v597 = vlaneseq
    %v598 = vshrl.u32 %v597, 7
    %v599 = vsub.s32 0, %v598
    %v600 = vrot.slane %v595, %v599
    %vm602 = vcmask 130048
    %v604 = vsel %vm602, %v592, 0
    %606 = vmatprep.subr.mxu0 0.0
    %607 = vmatpush1.msra.mxu0 %v593
    %608 = vmatprep.subr.mxu0 0.0
    %609 = vmatpush1.msra.mxu0 %v594
    %610 = vmatprep.subr.mxu0 0.0
    %611 = vmatpush1.msra.mxu0 0.0
    %612 = vmatprep.subr.mxu0 0.0
    %613 = vmatpush1.msra.mxu0 0.0
    %614 = vmatprep.subr.mxu0 0.0
    %615 = vmatpush1.msra.mxu0 0.0
    %616 = vmatprep.subr.mxu0 0.0
    %617 = vmatpush1.msra.mxu0 0.0
    %618 = vmatprep.subr.mxu0 0.0
    %619 = vmatpush1.msra.mxu0 0.0
    %620 = vmatprep.subr.mxu0 0.0
    %621 = vmatpush1.msra.mxu0 0.0
    %622 = vmatprep.subr.mxu0 0.0
    %623 = vmatpush1.msra.mxu0 0.0
    %624 = vmatprep.subr.mxu0 0.0
    %625 = vmatpush1.msra.mxu0 0.0
    %626 = vmatprep.subr.mxu0 0.0
    %627 = vmatpush1.msra.mxu0 0.0
    %628 = vmatprep.subr.mxu0 0.0
    %629 = vmatpush1.msra.mxu0 0.0
    %630 = vmatprep.subr.mxu0 0.0
    %631 = vmatpush1.msra.mxu0 0.0
    %632 = vmatprep.subr.mxu0 0.0
    %633 = vmatpush1.msra.mxu0 0.0
    %634 = vmatprep.subr.mxu0 0.0
    %635 = vmatpush1.msra.mxu0 0.0
    %636 = vmatprep.subr.mxu0 0.0
    %637 = vmatpush1.msra.mxu0 0.0
    %638 = vmatprep.subr.mxu0 0.0
    %639 = vmatpush1.msra.mxu0 0.0
    %640 = vmatprep.subr.mxu0 0.0
    %641 = vmatpush1.msra.mxu0 0.0
    %642 = vmatprep.subr.mxu0 0.0
    %643 = vmatpush1.msra.mxu0 0.0
    %644 = vmatprep.subr.mxu0 0.0
    %645 = vmatpush1.msra.mxu0 0.0
    %646 = vmatprep.subr.mxu0 0.0
    %647 = vmatpush1.msra.mxu0 0.0
    %648 = vmatprep.subr.mxu0 0.0
    %649 = vmatpush1.msra.mxu0 0.0
    %650 = vmatprep.subr.mxu0 0.0
    %651 = vmatpush1.msra.mxu0 0.0
    %652 = vmatprep.subr.mxu0 0.0
    %653 = vmatpush1.msra.mxu0 0.0
    %654 = vmatprep.subr.mxu0 0.0
    %655 = vmatpush1.msra.mxu0 0.0
    %656 = vmatprep.subr.mxu0 0.0
    %657 = vmatpush1.msra.mxu0 0.0
    %658 = vmatprep.subr.mxu0 0.0
    %659 = vmatpush1.msra.mxu0 0.0
    %660 = vmatprep.subr.mxu0 0.0
    %661 = vmatpush1.msra.mxu0 0.0
    %662 = vmatprep.subr.mxu0 0.0
    %663 = vmatpush1.msra.mxu0 0.0
    %664 = vmatprep.subr.mxu0 0.0
    %665 = vmatpush1.msra.mxu0 0.0
    %666 = vmatprep.subr.mxu0 0.0
    %667 = vmatpush1.msra.mxu0 0.0
    %668 = vmatprep.subr.mxu0 0.0
    %669 = vmatpush1.msra.mxu0 0.0
    %670 = vmatprep.mubr.f32.mxu0 0.0
    %671 = vmatmul.mubr.f32.gmra.mrb[0].mxu0 %v604
    %v672 = vpop.f32.mrb[0].mxu0
    %v673 = vadd.f32 %v600, %v672
    %v674 = vpop.f32.mrb[0].mxu0
    %675 = vdwg.mxu0
    %vm676 = vcmask 17408
    %677 = vst.msk [vmem:[#allocation6] sm:$0x3] %vm676, %v673
    // Predicated region
    $region30: #{tpu_custom_call.1} parent=1 // pred_check
      _
    $region31: #{tpu_custom_call.1} parent=1 // pred_check_branch
      %679 = sbr.rel (0) target = $region33
    $region32: #{tpu_custom_call.1} parent=1 // pred_region
      %s681 = ssub.s32 1024, 1024
      %682 = vsyncadd [#allocation3], %s681
      %s683 = sshll.u32 [#allocation2], 4
      %s684 = int_to_ptr.vmem [resolvable:$true] %s683
      %689 = dma.vmem_to_hbm [thread:$0]  %s684, 1024, %s7, [#allocation3], 256, 256, 16
    $region33: #{tpu_custom_call.1} parent=1 // pred_fallthru
      _
    // Predicated region
    $region34: #{tpu_custom_call.1} parent=1 // pred_check
      _
    $region35: #{tpu_custom_call.1} parent=1 // pred_check_branch
      %691 = sbr.rel (0) target = $region37
    $region36: #{tpu_custom_call.1} parent=1 // pred_region
      %s693 = ssub.s32 32, 32
      %694 = vsyncadd [#allocation5], %s693
      %s696 = sshll.u32 [#allocation4], 4
      %s697 = int_to_ptr.vmem [resolvable:$true] %s696
      %699 = dma.vmem_to_hbm [thread:$0]  %s697, 32, %s8, [#allocation5]
    $region37: #{tpu_custom_call.1} parent=1 // pred_fallthru
      _
    // Predicated region
    $region38: #{tpu_custom_call.1} parent=1 // pred_check
      _
    $region39: #{tpu_custom_call.1} parent=1 // pred_check_branch
      %701 = sbr.rel (0) target = $region41
    $region40: #{tpu_custom_call.1} parent=1 // pred_region
      %s703 = ssub.s32 32, 32
      %704 = vsyncadd [#allocation5], %s703
      %s706 = sshll.u32 [#allocation6], 4
      %s707 = int_to_ptr.vmem [resolvable:$true] %s706
      %709 = dma.vmem_to_hbm [thread:$0]  %s707, 32, %s9, [#allocation5]
    $region41: #{tpu_custom_call.1} parent=1 // pred_fallthru
      _
    // Predicated region
    $region42: #{tpu_custom_call.1} parent=1 // pred_check
      _
    $region43: #{tpu_custom_call.1} parent=1 // pred_check_branch
      %711 = sbr.rel (0) target = $region45
    $region44: #{tpu_custom_call.1} parent=1 // pred_region
      %712 = dma.done [#allocation3], 1024
    $region45: #{tpu_custom_call.1} parent=1 // pred_fallthru
      _
    // Predicated region
    $region46: #{tpu_custom_call.1} parent=1 // pred_check
      _
    $region47: #{tpu_custom_call.1} parent=1 // pred_check_branch
      %714 = sbr.rel (0) target = $region49
    $region48: #{tpu_custom_call.1} parent=1 // pred_region
      %715 = dma.done [#allocation5], 32
    $region49: #{tpu_custom_call.1} parent=1 // pred_fallthru
      _
    // Predicated region
    $region50: #{tpu_custom_call.1} parent=1 // pred_check
      _
    $region51: #{tpu_custom_call.1} parent=1 // pred_check_branch
      %717 = sbr.rel (0) target = $region53
    $region52: #{tpu_custom_call.1} parent=1 // pred_region
      %718 = dma.done [#allocation5], 32
    $region53: #{tpu_custom_call.1} parent=1 // pred_fallthru
      _
    %719 = vsyncpa [#allocation3], 1
    %720 = vsyncpa [#allocation5], 1

</llo_original>
